<compile_context>
chip_gen: v7x
topology: tpu7x:2x2x1
jax: 0.10.0
libtpu: 0.0.40
codegen_flags: <defaults>
</compile_context>

<pallas_src>
import numpy as np
import jax
import jax.numpy as jnp
from jax.experimental import pallas as pl
from jax.experimental.pallas import tpu as pltpu

C_PAD = 16   # total conv output channels (sum(filter_num)=14) padded to 16
P_PAD = 32   # conv window positions (max 23) padded to a power of two (for the tree max)


# ----------------------------------------------------------------------------
# Kernel 1: fused Conv1d (all branches) + ReLU + AdaptiveMaxPool1d(1) + concat
# ----------------------------------------------------------------------------
def _conv_fused_kernel(x_ref, w_ref, b_ref, out_ref):
    """x:(tile_n, F*A) f32, w:(F*A, P_PAD*C_PAD) bf16, b:(1, C_PAD) f32 -> out:(tile_n, C_PAD)."""
    c_pad = out_ref.shape[-1]
    # One big MXU matmul (bf16 operands, f32 accumulation) replaces the 27 tiny
    # per-offset matmuls of the per-branch formulation.
    acc = jnp.dot(x_ref[...].astype(jnp.bfloat16), w_ref[...],
                  preferred_element_type=jnp.float32)          # (tile_n, P_PAD*C_PAD)
    # Tree max over the position axis.  Layout is channel-fastest (col = p*C_PAD + ch),
    # so every fold is an element-wise maximum of two aligned halves (no relayout of
    # the accumulator beyond the final sub-128-lane folds).
    while acc.shape[-1] > c_pad:
        half = acc.shape[-1] // 2
        acc = jnp.maximum(acc[:, :half], acc[:, half:])
    # Conv bias folded into the epilogue: relu(max_p(conv) + b) == maxpool(relu(conv + b)).
    out_ref[...] = jnp.maximum(acc + b_ref[...], 0.0)


def conv_features(x_flat, w_fused, b_fused, tile_n):
    N, K = x_flat.shape
    Kw, ncols = w_fused.shape
    c_pad = b_fused.shape[-1]
    return pl.pallas_call(
        _conv_fused_kernel,
        out_shape=jax.ShapeDtypeStruct((N, c_pad), jnp.float32),
        grid=(pl.cdiv(N, tile_n),),
        in_specs=[pl.BlockSpec((tile_n, K), lambda i: (i, 0)),
                  pl.BlockSpec((Kw, ncols), lambda i: (0, 0)),   # resident fused weight
                  pl.BlockSpec((1, c_pad), lambda i: (0, 0))],
        out_specs=pl.BlockSpec((tile_n, c_pad), lambda i: (i, 0)),
        compiler_params=pltpu.CompilerParams(dimension_semantics=("parallel",)),
    )(x_flat, w_fused, b_fused)


def build_fused_conv_params(conv_w, conv_b, kernel_size, filter_num, aa_num, feature_num):
    """Pack per-branch Conv1d weights (torch layout (c, F, h)) into one Toeplitz matrix."""
    C = sum(filter_num)
    assert C <= C_PAD
    assert max(aa_num - h + 1 for h in kernel_size) <= P_PAD
    K = feature_num * aa_num
    W = np.zeros((K, P_PAD * C_PAD), np.float32)
    bias = np.zeros((1, C_PAD), np.float32)
    ch_g = 0
    for (h, c), w, b in zip(zip(kernel_size, filter_num), conv_w, conv_b):
        w = np.asarray(w)                      # (c, feature_num, h)
        b = np.asarray(b)                      # (c,)
        P = aa_num - h + 1
        for cl in range(c):
            for p in range(P_PAD):
                pe = min(p, P - 1)             # clamp: duplicate a valid column (max-safe)
                col = np.zeros((K,), np.float32)
                for o in range(h):
                    # x_flat index of feature f at sequence position (pe + o) is f*aa_num + pe + o
                    col[np.arange(feature_num) * aa_num + (pe + o)] = w[cl, :, o]
                W[:, p * C_PAD + ch_g] = col
            bias[0, ch_g] = float(b[cl])
            ch_g += 1
    return W, bias


# ----------------------------------------------------------------------------
# Kernel 2: fclayer1+ReLU, waout, sparsemax attention, pooling,
#           decoder_f (BN folded) + ReLU, decoder_s
# ----------------------------------------------------------------------------
def _head_kernel(feat_ref, w1_ref, b1_ref, watt_ref, wf_ref, bf_ref,
                 ws_ref, bs_ref, out_ref, attw_ref):
    Bt, T, Cin = feat_ref.shape
    C = w1_ref.shape[1]
    feat = feat_ref[...].reshape(Bt * T, Cin)

    # fclayer1 -> (eval) dropout -> ReLU   (w1 is zero-padded on the dummy input channels)
    h1 = jnp.maximum(
        jnp.dot(feat, w1_ref[...], preferred_element_type=jnp.float32) + b1_ref[...], 0.0)

    # waout (no bias): attention logits via MXU matmul (Bt*T, C) @ (C, 1)
    z = jnp.dot(h1, watt_ref[...], preferred_element_type=jnp.float32).reshape(Bt, T)

    # sparsemax over the tcr dimension -- sort-free O(T^2) formulation:
    #   support = { i : 1 + k_i * z_i > sum_{z_j >= z_i} z_j },  k_i = #{j: z_j >= z_i}
    # TODO(synk): for very large tcr_num switch to the sort/cumsum formulation to avoid
    #             the (Bt, T, T) intermediate.
    zj = z[:, None, :]
    ge = (zj >= z[:, :, None]).astype(jnp.float32)       # (Bt, T, T)
    k = jnp.sum(ge, axis=2)
    s = jnp.sum(ge * zj, axis=2)
    in_support = ((1.0 + k * z) > s).astype(jnp.float32)
    supp_size = jnp.sum(in_support, axis=1, keepdims=True)
    tau = (jnp.sum(in_support * z, axis=1, keepdims=True) - 1.0) / supp_size
    attw = jnp.maximum(z - tau, 0.0)                     # (Bt, T)
    attw_ref[...] = attw

    # bmm(attw[:, None, :], h1) -> attention-weighted pooling
    h1_3 = h1.reshape(Bt, T, C)
    pooled = jnp.sum(attw[:, :, None] * h1_3, axis=1)    # (Bt, C)

    # decoder_f with eval-mode BatchNorm folded into (wf_ref, bf_ref) -> ReLU -> decoder_s
    d = jnp.maximum(
        jnp.dot(pooled, wf_ref[...], preferred_element_type=jnp.float32) + bf_ref[...], 0.0)
    out_ref[...] = jnp.dot(d, ws_ref[...], preferred_element_type=jnp.float32) + bs_ref[...]


def head(feats, head_params, tile_b):
    B, T, Cin = feats.shape

    def full(shape):
        n = len(shape)
        return pl.BlockSpec(shape, lambda i, _n=n: (0,) * _n)

    in_specs = [pl.BlockSpec((tile_b, T, Cin), lambda i: (i, 0, 0))] + \
               [full(a.shape) for a in head_params]

    return pl.pallas_call(
        _head_kernel,
        out_shape=(jax.ShapeDtypeStruct((B, 2), jnp.float32),
                   jax.ShapeDtypeStruct((B, T), jnp.float32)),
        grid=(pl.cdiv(B, tile_b),),
        in_specs=in_specs,
        out_specs=(pl.BlockSpec((tile_b, 2), lambda i: (i, 0)),
                   pl.BlockSpec((tile_b, T), lambda i: (i, 0))),
        compiler_params=pltpu.CompilerParams(dimension_semantics=("parallel",)),
    )(feats, *head_params)


# ----------------------------------------------------------------------------
# Plain-JAX wrapper (glue: reshapes / parameter folding; no transpose of x)
# ----------------------------------------------------------------------------
def minn_sa_forward(x, params, *, tcr_num, aa_num, feature_num, kernel_size, filter_num):
    del kernel_size, filter_num            # already folded into the fused conv weight
    # torch: x.reshape(-1, F, A); flattening (F, A) row-major keeps the natural layout.
    x_flat = x.reshape(-1, feature_num * aa_num).astype(jnp.float32)
    N = x_flat.shape[0]
    B = N // tcr_num
    tile_n = min(1024, N)                  # large row tiles; pl.cdiv grid handles any tail
    feats = conv_features(x_flat, params["w_fused"], params["b_fused"], tile_n)  # (N, C_PAD)
    feats = feats.reshape(B, tcr_num, feats.shape[-1])

    # Fold eval-mode BatchNorm1d into decoder_f (tiny (C,C) op, done outside the kernel):
    #   relu(bn(pooled @ wf + bf)) == relu(pooled @ (wf*scale) + (bf*scale + shift))
    wf_eff = params["wf"] * params["bn_scale"]
    bf_eff = params["bf"] * params["bn_scale"] + params["bn_shift"]

    tile_b = 8 if B >= 8 else B
    head_params = (params["w1p"], params["b1"], params["watt"],
                   wf_eff, bf_eff, params["ws"], params["bs"])
    logits, attw = head(feats, head_params, tile_b)
    return logits, attw


def init_params(key, feature_num, aa_num, kernel_size, filter_num):
    C = sum(filter_num)
    ks = iter(jax.random.split(key, 2 * len(kernel_size) + 7))
    conv_w, conv_b = [], []
    for h, c in zip(kernel_size, filter_num):
        conv_w.append(0.1 * jax.random.normal(next(ks), (c, feature_num, h), jnp.float32))
        conv_b.append(0.1 * jax.random.normal(next(ks), (c,), jnp.float32))
    W, bias = build_fused_conv_params(conv_w, conv_b, kernel_size, filter_num,
                                      aa_num, feature_num)
    p = {"conv_w": conv_w, "conv_b": conv_b,
         "w_fused": jnp.asarray(W, jnp.bfloat16),      # bf16 MXU operands, f32 accumulate
         "b_fused": jnp.asarray(bias, jnp.float32)}
    w1 = 0.1 * jax.random.normal(next(ks), (C, C), jnp.float32)        # fclayer1.weight.T
    p["w1p"] = jnp.zeros((C_PAD, C), jnp.float32).at[:C].set(w1)       # zero rows for pad channels
    p["b1"] = 0.1 * jax.random.normal(next(ks), (1, C), jnp.float32)
    p["watt"] = 0.1 * jax.random.normal(next(ks), (C, 1), jnp.float32)  # waout.weight.T
    p["wf"] = 0.1 * jax.random.normal(next(ks), (C, C), jnp.float32)    # decoder_f.weight.T
    p["bf"] = 0.1 * jax.random.normal(next(ks), (1, C), jnp.float32)
    p["ws"] = 0.1 * jax.random.normal(next(ks), (C, 2), jnp.float32)    # decoder_s.weight.T
    p["bs"] = 0.1 * jax.random.normal(next(ks), (1, 2), jnp.float32)
    # BatchNorm1d (eval) with default stats: gamma=1, beta=0, mean=0, var=1, eps=1e-5
    eps = 1e-5
    p["bn_scale"] = jnp.full((1, C), 1.0 / np.sqrt(1.0 + eps), jnp.float32)
    p["bn_shift"] = jnp.zeros((1, C), jnp.float32)
    return p


# ----------------------------------------------------------------------------
# Plain-JAX references for validation
# ----------------------------------------------------------------------------
def conv_feats_reference(x, conv_w, conv_b, kernel_size, filter_num, aa_num, feature_num):
    """Plain-JAX reference for Conv1d + ReLU + AdaptiveMaxPool1d(1) + concat (f32)."""
    xr = x.reshape(-1, feature_num, aa_num).astype(jnp.float32)
    outs = []
    for (h, c), w, b in zip(zip(kernel_size, filter_num), conv_w, conv_b):
        P = aa_num - h + 1
        cols = []
        for p_ in range(P):
            win = xr[:, :, p_:p_ + h]                                    # (N, F, h)
            cols.append(jnp.einsum('nfo,cfo->nc', win, w) + b[None, :])  # (N, c)
        conv = jnp.stack(cols, axis=-1)                                  # (N, c, P)
        outs.append(jnp.max(jax.nn.relu(conv), axis=-1))
    return jnp.concatenate(outs, axis=1)                                 # (N, sum(filter_num))


def sparsemax_reference(z):
    """Sort-based sparsemax along axis=1."""
    zs = jnp.sort(z, axis=1)[:, ::-1]
    kk = jnp.arange(1, z.shape[1] + 1, dtype=jnp.float32)[None, :]
    css = jnp.cumsum(zs, axis=1)
    support = (1.0 + kk * zs) > css
    ksup = jnp.sum(support.astype(jnp.float32), axis=1, keepdims=True)
    tau = (jnp.sum(jnp.where(support, zs, 0.0), axis=1, keepdims=True) - 1.0) / ksup
    return jnp.maximum(z - tau, 0.0)


def head_reference(feats, p):
    """Plain-JAX f32 reference for the head (un-folded BatchNorm path)."""
    h1 = jax.nn.relu(jnp.einsum('btc,cd->btd', feats, p["w1p"]) + p["b1"][None])
    z = jnp.einsum('btd,do->bt', h1, p["watt"])
    attw = sparsemax_reference(z)
    pooled = jnp.einsum('bt,btd->bd', attw, h1)
    d = pooled @ p["wf"] + p["bf"]
    d = jax.nn.relu(d * p["bn_scale"] + p["bn_shift"])
    logits = d @ p["ws"] + p["bs"]
    return logits, attw


if __name__ == "__main__":
    # Small-but-consistent shapes: feature_num / aa_num keep the module defaults
    # (conv kernel sizes go up to 7); tcr_num shrunk to 8, batch = 2.
    B, T, F, A = 2, 8, 15, 24
    kernel_size = [2, 3, 4, 5, 6, 7]
    filter_num = [3, 3, 3, 2, 2, 1]

    key = jax.random.PRNGKey(0)
    k_params, k_x = jax.random.split(key)
    params = init_params(k_params, F, A, kernel_size, filter_num)
    x = jax.random.normal(k_x, (B, T, F, A), jnp.float32)

    logits, attw = minn_sa_forward(
        x, params, tcr_num=T, aa_num=A, feature_num=F,
        kernel_size=kernel_size, filter_num=filter_num)
    logits, attw = jax.block_until_ready((logits, attw))

    # ---- Check 1: fused conv vs plain-JAX f32 reference (bf16 operands -> loose tol)
    x_flat = x.reshape(-1, F * A).astype(jnp.float32)
    feats_k = conv_features(x_flat, params["w_fused"], params["b_fused"],
                            min(1024, x_flat.shape[0]))                 # (N, C_PAD)
    feats_r = conv_feats_reference(x, params["conv_w"], params["conv_b"],
                                   kernel_size, filter_num, A, F)
    C = sum(filter_num)
    assert bool(jnp.all(jnp.abs(feats_k[:, :C] - feats_r) < 1e-1)), "conv feature mismatch"
    assert bool(jnp.all(feats_k[:, C:] == 0.0)), "pad channels not zero"

    # ---- Check 2: head kernel vs plain-JAX f32 reference on the same features
    logits_r, attw_r = head_reference(feats_k.reshape(B, T, C_PAD), params)
    assert bool(jnp.all(jnp.abs(logits - logits_r) < 1e-3)), "head logits mismatch"
    assert bool(jnp.all(jnp.abs(attw - attw_r) < 1e-3)), "sparsemax attention mismatch"

    # ---- Basic invariants
    assert logits.shape == (B, 2), logits.shape
    assert attw.shape == (B, T), attw.shape
    row_sums = jnp.sum(attw, axis=1)
    assert bool(jnp.all(jnp.abs(row_sums - 1.0) < 1e-3)), row_sums
    assert bool(jnp.all(attw >= 0.0))
    assert bool(jnp.all(jnp.isfinite(logits)))

    print("KERNEL_OK")
</pallas_src>

<mosaic_0001>
module attributes {stable_mosaic.version = 11 : i64} {
  func.func @_conv_fused_kernel(%arg0: i32, %arg1: memref<16x360xf32, #tpu.memory_space<vmem>>, %arg2: memref<360x512xbf16, #tpu.memory_space<vmem>>, %arg3: memref<1x16xf32, #tpu.memory_space<vmem>>, %arg4: memref<16x16xf32, #tpu.memory_space<vmem>>) attributes {dimension_semantics = [#tpu.dimension_semantics<parallel>], iteration_bounds = array<i64: 1>, scalar_prefetch = 0 : i64, scratch_operands = 0 : i64, tpu.core_type = #tpu.core_type<tc>, window_params = [{transform_indices = @transform_0, window_bounds = array<i64: 16, 360>}, {pipeline_mode = #tpu.pipeline_mode<synchronous>, transform_indices = @transform_1, window_bounds = array<i64: 360, 512>}, {pipeline_mode = #tpu.pipeline_mode<synchronous>, transform_indices = @transform_2, window_bounds = array<i64: 1, 16>}, {transform_indices = @transform_3, window_bounds = array<i64: 16, 16>}]} {
    %c0 = arith.constant 0 : index
    %c0_0 = arith.constant 0 : index
    %0 = vector.load %arg1[%c0, %c0_0] : memref<16x360xf32, #tpu.memory_space<vmem>>, vector<16x360xf32>
    %1 = arith.truncf %0 : vector<16x360xf32> to vector<16x360xbf16>
    %c0_1 = arith.constant 0 : index
    %c0_2 = arith.constant 0 : index
    %2 = vector.load %arg2[%c0_1, %c0_2] : memref<360x512xbf16, #tpu.memory_space<vmem>>, vector<360x512xbf16>
    %cst = arith.constant dense<0.000000e+00> : vector<16x512xf32>
    %3 = tpu.matmul %1, %2, %cst {dimension_numbers = #tpu.dot_dimension_numbers<[1], [0], [0], [1], [0, 0, 1, 1], [], []>} : vector<16x360xbf16>, vector<360x512xbf16>, vector<16x512xf32> -> vector<16x512xf32>
    %4 = vector.extract_strided_slice %3 {offsets = [0, 0], sizes = [16, 256], strides = [1, 1]} : vector<16x512xf32> to vector<16x256xf32>
    %5 = vector.extract_strided_slice %3 {offsets = [0, 256], sizes = [16, 256], strides = [1, 1]} : vector<16x512xf32> to vector<16x256xf32>
    %6 = arith.maximumf %4, %5 : vector<16x256xf32>
    %7 = vector.extract_strided_slice %6 {offsets = [0, 0], sizes = [16, 128], strides = [1, 1]} : vector<16x256xf32> to vector<16x128xf32>
    %8 = vector.extract_strided_slice %6 {offsets = [0, 128], sizes = [16, 128], strides = [1, 1]} : vector<16x256xf32> to vector<16x128xf32>
    %9 = arith.maximumf %7, %8 : vector<16x128xf32>
    %10 = vector.extract_strided_slice %9 {offsets = [0, 0], sizes = [16, 64], strides = [1, 1]} : vector<16x128xf32> to vector<16x64xf32>
    %11 = vector.extract_strided_slice %9 {offsets = [0, 64], sizes = [16, 64], strides = [1, 1]} : vector<16x128xf32> to vector<16x64xf32>
    %12 = arith.maximumf %10, %11 : vector<16x64xf32>
    %13 = vector.extract_strided_slice %12 {offsets = [0, 0], sizes = [16, 32], strides = [1, 1]} : vector<16x64xf32> to vector<16x32xf32>
    %14 = vector.extract_strided_slice %12 {offsets = [0, 32], sizes = [16, 32], strides = [1, 1]} : vector<16x64xf32> to vector<16x32xf32>
    %15 = arith.maximumf %13, %14 : vector<16x32xf32>
    %16 = vector.extract_strided_slice %15 {offsets = [0, 0], sizes = [16, 16], strides = [1, 1]} : vector<16x32xf32> to vector<16x16xf32>
    %17 = vector.extract_strided_slice %15 {offsets = [0, 16], sizes = [16, 16], strides = [1, 1]} : vector<16x32xf32> to vector<16x16xf32>
    %18 = arith.maximumf %16, %17 : vector<16x16xf32>
    %c0_3 = arith.constant 0 : index
    %c0_4 = arith.constant 0 : index
    %19 = vector.load %arg3[%c0_3, %c0_4] : memref<1x16xf32, #tpu.memory_space<vmem>>, vector<1x16xf32>
    %20 = vector.broadcast %19 : vector<1x16xf32> to vector<16x16xf32>
    %21 = arith.addf %18, %20 : vector<16x16xf32>
    %cst_5 = arith.constant 0.000000e+00 : f32
    %22 = vector.broadcast %cst_5 : f32 to vector<16x16xf32>
    %23 = arith.maximumf %21, %22 : vector<16x16xf32>
    %c0_6 = arith.constant 0 : index
    %c0_7 = arith.constant 0 : index
    %24 = vector.load %arg4[%c0_6, %c0_7] : memref<16x16xf32, #tpu.memory_space<vmem>>, vector<16x16xf32>
    tpu.vector_store %arg4[%c0_6, %c0_7], %23 {strides = array<i32>} : memref<16x16xf32, #tpu.memory_space<vmem>>, vector<16x16xf32>,
    return
  }
  func.func @transform_0(%arg0: i32) -> (i32, i32) {
    %c0_i32 = arith.constant 0 : i32
    %c0_i32_0 = arith.constant 0 : i32
    return %arg0, %c0_i32 : i32, i32
  }
  func.func @transform_1(%arg0: i32) -> (i32, i32) {
    %c0_i32 = arith.constant 0 : i32
    %c0_i32_0 = arith.constant 0 : i32
    %c0_i32_1 = arith.constant 0 : i32
    return %c0_i32, %c0_i32_0 : i32, i32
  }
  func.func @transform_2(%arg0: i32) -> (i32, i32) {
    %c0_i32 = arith.constant 0 : i32
    %c0_i32_0 = arith.constant 0 : i32
    %c0_i32_1 = arith.constant 0 : i32
    return %c0_i32, %c0_i32_0 : i32, i32
  }
  func.func @transform_3(%arg0: i32) -> (i32, i32) {
    %c0_i32 = arith.constant 0 : i32
    %c0_i32_0 = arith.constant 0 : i32
    return %arg0, %c0_i32 : i32, i32
  }
}

</mosaic_0001>

<llo_original>
// kernel: tpu_custom_call.1
$region0: #{tpu_custom_call.1}
  #allocation0 [shape = 'u32[]', space=smem, size = 0x4, offset = 0x4, fixed_abs, tag = 'smem constant byte address 0x4 - core index']
  #allocation1 [shape = 'u32[144,128]{1,0:T(1,128)}', space=vmem, size = 0x12000, scoped, tag = 'internal scratch']
  %s0 = inlined_call_operand.hbm [shape: f32[16,360], index: 0, kind: input, shape index: {}]
  %s1 = inlined_call_operand.hbm [shape: bf16[360,512], index: 1, kind: input, shape index: {}]
  %s2 = inlined_call_operand.vmem [shape: f32[1,16], index: 2, kind: input, shape index: {}]
  %s3 = inlined_call_operand.hbm [shape: f32[16,16], index: 3, kind: output, shape index: {}]
  %s4 = sld [smem:[#allocation0]]
  $region30: #{tpu_custom_call.1} parent=0
    _
  %s6 = ssub.s32 1, %s4
  %s7 = scalar_select 0, %s6, %s4
  $region1: #{tpu_custom_call.1} parent=0
    #allocation2 [shape = 'u8[24576]{0}', space=vmem, size = 0x6000, scoped, tag = 'input window, operand 0, single buffered']
    #allocation3 [shape = 's32[1]{0}', space=sflag, size = 0x4, scoped, tag = 'scoped memory for tpu_custom_call.1']
    #allocation4 [shape = 's32[1]{0}', space=sflag, size = 0x4, scoped, tag = 'scoped memory for tpu_custom_call.1']
    #allocation5 [shape = 'u8[368640]{0}', space=vmem, size = 0x5a000, scoped, tag = 'input window, operand 1, single buffered']
    #allocation6 [shape = 's32[1]{0}', space=sflag, size = 0x4, scoped, tag = 'scoped memory for tpu_custom_call.1']
    #allocation7 [shape = 'u8[8192]{0}', space=vmem, size = 0x2000, scoped, tag = 'output window, operand 0, single buffered']
    %8 = vsyncpa [#allocation3], 0
    %9 = vsyncpa [#allocation6], 0
    %10 = vsyncpa [#allocation4], 0
    // Predicated region
    $region2: #{tpu_custom_call.1} parent=1 // pred_check
      _
    $region3: #{tpu_custom_call.1} parent=1 // pred_check_branch
      %12 = sbr.rel (0) target = $region5
    $region4: #{tpu_custom_call.1} parent=1 // pred_region
      %s14 = ssub.s32 768, 768
      %15 = vsyncadd [#allocation3], %s14
      %s16 = sshll.u32 [#allocation2], 4
      %s17 = int_to_ptr.vmem [resolvable:$true] %s16
      %22 = dma.hbm_to_vmem [thread:$0]  %s0, 768, %s17, [#allocation3], 384, 384, 24
    $region5: #{tpu_custom_call.1} parent=1 // pred_fallthru
      _
    // Predicated region
    $region6: #{tpu_custom_call.1} parent=1 // pred_check
      _
    $region7: #{tpu_custom_call.1} parent=1 // pred_check_branch
      %24 = sbr.rel (0) target = $region9
    $region8: #{tpu_custom_call.1} parent=1 // pred_region
      %s26 = ssub.s32 11520, 11520
      %27 = vsyncadd [#allocation6], %s26
      %s28 = sshll.u32 [#allocation5], 4
      %s29 = int_to_ptr.vmem [resolvable:$true] %s28
      %34 = dma.hbm_to_vmem [thread:$0]  %s1, 11520, %s29, [#allocation6], 256, 256, 16
    $region9: #{tpu_custom_call.1} parent=1 // pred_fallthru
      _
    // Predicated region
    $region10: #{tpu_custom_call.1} parent=1 // pred_check
      _
    $region11: #{tpu_custom_call.1} parent=1 // pred_check_branch
      %36 = sbr.rel (0) target = $region13
    $region12: #{tpu_custom_call.1} parent=1 // pred_region
      _
    $region13: #{tpu_custom_call.1} parent=1 // pred_fallthru
      _
    // Predicated region
    $region14: #{tpu_custom_call.1} parent=1 // pred_check
      _
    $region15: #{tpu_custom_call.1} parent=1 // pred_check_branch
      %38 = sbr.rel (0) target = $region17
    $region16: #{tpu_custom_call.1} parent=1 // pred_region
      %39 = dma.done [#allocation3], 768
    $region17: #{tpu_custom_call.1} parent=1 // pred_fallthru
      _
    // Predicated region
    $region18: #{tpu_custom_call.1} parent=1 // pred_check
      _
    $region19: #{tpu_custom_call.1} parent=1 // pred_check_branch
      %41 = sbr.rel (0) target = $region21
    $region20: #{tpu_custom_call.1} parent=1 // pred_region
      %42 = dma.done [#allocation6], 11520
    $region21: #{tpu_custom_call.1} parent=1 // pred_fallthru
      _
    %v44 = vld [vmem:[#allocation2] sm:$0xff]
    %v45 = vld [vmem:[#allocation2 + $0x8] sm:$0xff]
    %v46 = vld [vmem:[#allocation2 + $0x10] sm:$0xff]
    %v47 = vld [vmem:[#allocation2 + $0x18] sm:$0xff]
    %v48 = vld [vmem:[#allocation2 + $0x20] sm:$0xff]
    %v49 = vld [vmem:[#allocation2 + $0x28] sm:$0xff]
    %v50 = vpack.c.bf16 %v47, %v44
    %v51 = vpack.c.bf16 %v48, %v45
    %v52 = vpack.c.bf16 %v49, %v46
    %v53 = vld [vmem:[#allocation5] sm:$0xff]
    %v54 = vld [vmem:[#allocation5 + $0x8] sm:$0xff]
    %v55 = vld [vmem:[#allocation5 + $0x10] sm:$0xff]
    %v56 = vld [vmem:[#allocation5 + $0x18] sm:$0xff]
    %v57 = vld [vmem:[#allocation5 + $0x20] sm:$0xff]
    %v58 = vld [vmem:[#allocation5 + $0x28] sm:$0xff]
    %v59 = vld [vmem:[#allocation5 + $0x30] sm:$0xff]
    %v60 = vld [vmem:[#allocation5 + $0x38] sm:$0xff]
    %v61 = vld [vmem:[#allocation5 + $0x40] sm:$0xff]
    %v62 = vld [vmem:[#allocation5 + $0x48] sm:$0xff]
    %v63 = vld [vmem:[#allocation5 + $0x50] sm:$0xff]
    %v64 = vld [vmem:[#allocation5 + $0x58] sm:$0xff]
    %v65 = vld [vmem:[#allocation5 + $0x60] sm:$0xff]
    %v66 = vld [vmem:[#allocation5 + $0x68] sm:$0xff]
    %v67 = vld [vmem:[#allocation5 + $0x70] sm:$0xff]
    %v68 = vld [vmem:[#allocation5 + $0x78] sm:$0xff]
    %v69 = vld [vmem:[#allocation5 + $0x80] sm:$0xff]
    %v70 = vld [vmem:[#allocation5 + $0x88] sm:$0xff]
    %v71 = vld [vmem:[#allocation5 + $0x90] sm:$0xff]
    %v72 = vld [vmem:[#allocation5 + $0x98] sm:$0xff]
    %v73 = vld [vmem:[#allocation5 + $0xa0] sm:$0xff]
    %v74 = vld [vmem:[#allocation5 + $0xa8] sm:$0xff]
    %v75 = vld [vmem:[#allocation5 + $0xb0] sm:$0xff]
    %v76 = vld [vmem:[#allocation5 + $0xb8] sm:$0xff]
    %v77 = vld [vmem:[#allocation5 + $0xc0] sm:$0xff]
    %v78 = vld [vmem:[#allocation5 + $0xc8] sm:$0xff]
    %v79 = vld [vmem:[#allocation5 + $0xd0] sm:$0xff]
    %v80 = vld [vmem:[#allocation5 + $0xd8] sm:$0xff]
    %v81 = vld [vmem:[#allocation5 + $0xe0] sm:$0xff]
    %v82 = vld [vmem:[#allocation5 + $0xe8] sm:$0xff]
    %v83 = vld [vmem:[#allocation5 + $0xf0] sm:$0xff]
    %v84 = vld [vmem:[#allocation5 + $0xf8] sm:$0xff]
    %v85 = vld [vmem:[#allocation5 + $0x100] sm:$0xff]
    %v86 = vld [vmem:[#allocation5 + $0x108] sm:$0xff]
    %v87 = vld [vmem:[#allocation5 + $0x110] sm:$0xff]
    %v88 = vld [vmem:[#allocation5 + $0x118] sm:$0xff]
    %v89 = vld [vmem:[#allocation5 + $0x120] sm:$0xff]
    %v90 = vld [vmem:[#allocation5 + $0x128] sm:$0xff]
    %v91 = vld [vmem:[#allocation5 + $0x130] sm:$0xff]
    %v92 = vld [vmem:[#allocation5 + $0x138] sm:$0xff]
    %v93 = vld [vmem:[#allocation5 + $0x140] sm:$0xff]
    %v94 = vld [vmem:[#allocation5 + $0x148] sm:$0xff]
    %v95 = vld [vmem:[#allocation5 + $0x150] sm:$0xff]
    %v96 = vld [vmem:[#allocation5 + $0x158] sm:$0xff]
    %v97 = vld [vmem:[#allocation5 + $0x160] sm:$0xff]
    %v98 = vld [vmem:[#allocation5 + $0x168] sm:$0xff]
    %v99 = vld [vmem:[#allocation5 + $0x170] sm:$0xff]
    %v100 = vld [vmem:[#allocation5 + $0x178] sm:$0xff]
    %v101 = vld [vmem:[#allocation5 + $0x180] sm:$0xff]
    %v102 = vld [vmem:[#allocation5 + $0x188] sm:$0xff]
    %v103 = vld [vmem:[#allocation5 + $0x190] sm:$0xff]
    %v104 = vld [vmem:[#allocation5 + $0x198] sm:$0xff]
    %v105 = vld [vmem:[#allocation5 + $0x1a0] sm:$0xff]
    %v106 = vld [vmem:[#allocation5 + $0x1a8] sm:$0xff]
    %v107 = vld [vmem:[#allocation5 + $0x1b0] sm:$0xff]
    %v108 = vld [vmem:[#allocation5 + $0x1b8] sm:$0xff]
    %v109 = vld [vmem:[#allocation5 + $0x1c0] sm:$0xff]
    %v110 = vld [vmem:[#allocation5 + $0x1c8] sm:$0xff]
    %v111 = vld [vmem:[#allocation5 + $0x1d0] sm:$0xff]
    %v112 = vld [vmem:[#allocation5 + $0x1d8] sm:$0xff]
    %v113 = vld [vmem:[#allocation5 + $0x1e0] sm:$0xff]
    %v114 = vld [vmem:[#allocation5 + $0x1e8] sm:$0xff]
    %v115 = vld [vmem:[#allocation5 + $0x1f0] sm:$0xff]
    %v116 = vld [vmem:[#allocation5 + $0x1f8] sm:$0xff]
    %v117 = vld [vmem:[#allocation5 + $0x200] sm:$0xff]
    %v118 = vld [vmem:[#allocation5 + $0x208] sm:$0xff]
    %v119 = vld [vmem:[#allocation5 + $0x210] sm:$0xff]
    %v120 = vld [vmem:[#allocation5 + $0x218] sm:$0xff]
    %v121 = vld [vmem:[#allocation5 + $0x220] sm:$0xff]
    %v122 = vld [vmem:[#allocation5 + $0x228] sm:$0xff]
    %v123 = vld [vmem:[#allocation5 + $0x230] sm:$0xff]
    %v124 = vld [vmem:[#allocation5 + $0x238] sm:$0xff]
    %v125 = vld [vmem:[#allocation5 + $0x240] sm:$0xff]
    %v126 = vld [vmem:[#allocation5 + $0x248] sm:$0xff]
    %v127 = vld [vmem:[#allocation5 + $0x250] sm:$0xff]
    %v128 = vld [vmem:[#allocation5 + $0x258] sm:$0xff]
    %v129 = vld [vmem:[#allocation5 + $0x260] sm:$0xff]
    %v130 = vld [vmem:[#allocation5 + $0x268] sm:$0xff]
    %v131 = vld [vmem:[#allocation5 + $0x270] sm:$0xff]
    %v132 = vld [vmem:[#allocation5 + $0x278] sm:$0xff]
    %v133 = vld [vmem:[#allocation5 + $0x280] sm:$0xff]
    %v134 = vld [vmem:[#allocation5 + $0x288] sm:$0xff]
    %v135 = vld [vmem:[#allocation5 + $0x290] sm:$0xff]
    %v136 = vld [vmem:[#allocation5 + $0x298] sm:$0xff]
    %v137 = vld [vmem:[#allocation5 + $0x2a0] sm:$0xff]
    %v138 = vld [vmem:[#allocation5 + $0x2a8] sm:$0xff]
    %v139 = vld [vmem:[#allocation5 + $0x2b0] sm:$0xff]
    %v140 = vld [vmem:[#allocation5 + $0x2b8] sm:$0xff]
    %v141 = vld [vmem:[#allocation5 + $0x2c0] sm:$0xff]
    %v142 = vld [vmem:[#allocation5 + $0x2c8] sm:$0xff]
    %v233 = vunpack.c.l.b16 %v53
    %v234 = vunpack.c.h.b16 %v53
    %v235 = vunpack.c.l.b16 %v54
    %v236 = vunpack.c.h.b16 %v54
    %v237 = vunpack.c.l.b16 %v55
    %v238 = vunpack.c.h.b16 %v55
    %v239 = vunpack.c.l.b16 %v56
    %v240 = vunpack.c.h.b16 %v56
    %v241 = vunpack.c.l.b16 %v57
    %v242 = vunpack.c.h.b16 %v57
    %v243 = vunpack.c.l.b16 %v58
    %v244 = vunpack.c.h.b16 %v58
    %v245 = vunpack.c.l.b16 %v59
    %v246 = vunpack.c.h.b16 %v59
    %v247 = vunpack.c.l.b16 %v60
    %v248 = vunpack.c.h.b16 %v60
    %v249 = vunpack.c.l.b16 %v61
    %v250 = vunpack.c.h.b16 %v61
    %v251 = vunpack.c.l.b16 %v62
    %v252 = vunpack.c.h.b16 %v62
    %v253 = vunpack.c.l.b16 %v63
    %v254 = vunpack.c.h.b16 %v63
    %v255 = vunpack.c.l.b16 %v64
    %v256 = vunpack.c.h.b16 %v64
    %v257 = vunpack.c.l.b16 %v65
    %v258 = vunpack.c.h.b16 %v65
    %v259 = vunpack.c.l.b16 %v66
    %v260 = vunpack.c.h.b16 %v66
    %v261 = vunpack.c.l.b16 %v67
    %v262 = vunpack.c.h.b16 %v67
    %v263 = vunpack.c.l.b16 %v68
    %v264 = vunpack.c.h.b16 %v68
    %v265 = vunpack.c.l.b16 %v69
    %v266 = vunpack.c.h.b16 %v69
    %v267 = vunpack.c.l.b16 %v70
    %v268 = vunpack.c.h.b16 %v70
    %v269 = vunpack.c.l.b16 %v71
    %v270 = vunpack.c.h.b16 %v71
    %v271 = vunpack.c.l.b16 %v72
    %v272 = vunpack.c.h.b16 %v72
    %v273 = vunpack.c.l.b16 %v73
    %v274 = vunpack.c.h.b16 %v73
    %v275 = vunpack.c.l.b16 %v74
    %v276 = vunpack.c.h.b16 %v74
    %v277 = vunpack.c.l.b16 %v75
    %v278 = vunpack.c.h.b16 %v75
    %v279 = vunpack.c.l.b16 %v76
    %v280 = vunpack.c.h.b16 %v76
    %v281 = vunpack.c.l.b16 %v77
    %v282 = vunpack.c.h.b16 %v77
    %v283 = vunpack.c.l.b16 %v78
    %v284 = vunpack.c.h.b16 %v78
    %v285 = vunpack.c.l.b16 %v79
    %v286 = vunpack.c.h.b16 %v79
    %v287 = vunpack.c.l.b16 %v80
    %v288 = vunpack.c.h.b16 %v80
    %v289 = vunpack.c.l.b16 %v81
    %v290 = vunpack.c.h.b16 %v81
    %v291 = vunpack.c.l.b16 %v82
    %v292 = vunpack.c.h.b16 %v82
    %v293 = vunpack.c.l.b16 %v83
    %v294 = vunpack.c.h.b16 %v83
    %v295 = vunpack.c.l.b16 %v84
    %v296 = vunpack.c.h.b16 %v84
    %v297 = vunpack.c.l.b16 %v85
    %v298 = vunpack.c.h.b16 %v85
    %v299 = vunpack.c.l.b16 %v86
    %v300 = vunpack.c.h.b16 %v86
    %v301 = vunpack.c.l.b16 %v87
    %v302 = vunpack.c.h.b16 %v87
    %v303 = vunpack.c.l.b16 %v88
    %v304 = vunpack.c.h.b16 %v88
    %v305 = vunpack.c.l.b16 %v89
    %v306 = vunpack.c.h.b16 %v89
    %v307 = vunpack.c.l.b16 %v90
    %v308 = vunpack.c.h.b16 %v90
    %v309 = vunpack.c.l.b16 %v91
    %v310 = vunpack.c.h.b16 %v91
    %v311 = vunpack.c.l.b16 %v92
    %v312 = vunpack.c.h.b16 %v92
    %v313 = vunpack.c.l.b16 %v93
    %v314 = vunpack.c.h.b16 %v93
    %v315 = vunpack.c.l.b16 %v94
    %v316 = vunpack.c.h.b16 %v94
    %v317 = vunpack.c.l.b16 %v95
    %v318 = vunpack.c.h.b16 %v95
    %v319 = vunpack.c.l.b16 %v96
    %v320 = vunpack.c.h.b16 %v96
    %v321 = vunpack.c.l.b16 %v97
    %v322 = vunpack.c.h.b16 %v97
    %v323 = vunpack.c.l.b16 %v98
    %v324 = vunpack.c.h.b16 %v98
    %v325 = vunpack.c.l.b16 %v99
    %v326 = vunpack.c.h.b16 %v99
    %v327 = vunpack.c.l.b16 %v100
    %v328 = vunpack.c.h.b16 %v100
    %v329 = vunpack.c.l.b16 %v101
    %v330 = vunpack.c.h.b16 %v101
    %v331 = vunpack.c.l.b16 %v102
    %v332 = vunpack.c.h.b16 %v102
    %v333 = vunpack.c.l.b16 %v103
    %v334 = vunpack.c.h.b16 %v103
    %v335 = vunpack.c.l.b16 %v104
    %v336 = vunpack.c.h.b16 %v104
    %v337 = vunpack.c.l.b16 %v105
    %v338 = vunpack.c.h.b16 %v105
    %v339 = vunpack.c.l.b16 %v106
    %v340 = vunpack.c.h.b16 %v106
    %v341 = vunpack.c.l.b16 %v107
    %v342 = vunpack.c.h.b16 %v107
    %v343 = vunpack.c.l.b16 %v108
    %v344 = vunpack.c.h.b16 %v108
    %v345 = vunpack.c.l.b16 %v109
    %v346 = vunpack.c.h.b16 %v109
    %v347 = vunpack.c.l.b16 %v110
    %v348 = vunpack.c.h.b16 %v110
    %v349 = vunpack.c.l.b16 %v111
    %v350 = vunpack.c.h.b16 %v111
    %v351 = vunpack.c.l.b16 %v112
    %v352 = vunpack.c.h.b16 %v112
    %v353 = vunpack.c.l.b16 %v113
    %v354 = vunpack.c.h.b16 %v113
    %v355 = vunpack.c.l.b16 %v114
    %v356 = vunpack.c.h.b16 %v114
    %v357 = vunpack.c.l.b16 %v115
    %v358 = vunpack.c.h.b16 %v115
    %v359 = vunpack.c.l.b16 %v116
    %v360 = vunpack.c.h.b16 %v116
    %v361 = vunpack.c.l.b16 %v117
    %v362 = vunpack.c.h.b16 %v117
    %v363 = vunpack.c.l.b16 %v118
    %v364 = vunpack.c.h.b16 %v118
    %v365 = vunpack.c.l.b16 %v119
    %v366 = vunpack.c.h.b16 %v119
    %v367 = vunpack.c.l.b16 %v120
    %v368 = vunpack.c.h.b16 %v120
    %v369 = vunpack.c.l.b16 %v121
    %v370 = vunpack.c.h.b16 %v121
    %v371 = vunpack.c.l.b16 %v122
    %v372 = vunpack.c.h.b16 %v122
    %v373 = vunpack.c.l.b16 %v123
    %v374 = vunpack.c.h.b16 %v123
    %v375 = vunpack.c.l.b16 %v124
    %v376 = vunpack.c.h.b16 %v124
    %v377 = vunpack.c.l.b16 %v125
    %v378 = vunpack.c.h.b16 %v125
    %v379 = vunpack.c.l.b16 %v126
    %v380 = vunpack.c.h.b16 %v126
    %v381 = vunpack.c.l.b16 %v127
    %v382 = vunpack.c.h.b16 %v127
    %v383 = vunpack.c.l.b16 %v128
    %v384 = vunpack.c.h.b16 %v128
    %v385 = vunpack.c.l.b16 %v129
    %v386 = vunpack.c.h.b16 %v129
    %v387 = vunpack.c.l.b16 %v130
    %v388 = vunpack.c.h.b16 %v130
    %v389 = vunpack.c.l.b16 %v131
    %v390 = vunpack.c.h.b16 %v131
    %v391 = vunpack.c.l.b16 %v132
    %v392 = vunpack.c.h.b16 %v132
    %v393 = vunpack.c.l.b16 %v133
    %v394 = vunpack.c.h.b16 %v133
    %v395 = vunpack.c.l.b16 %v134
    %v396 = vunpack.c.h.b16 %v134
    %v397 = vunpack.c.l.b16 %v135
    %v398 = vunpack.c.h.b16 %v135
    %v399 = vunpack.c.l.b16 %v136
    %v400 = vunpack.c.h.b16 %v136
    %v401 = vunpack.c.l.b16 %v137
    %v402 = vunpack.c.h.b16 %v137
    %v403 = vunpack.c.l.b16 %v138
    %v404 = vunpack.c.h.b16 %v138
    %v405 = vunpack.c.l.b16 %v139
    %v406 = vunpack.c.h.b16 %v139
    %v407 = vunpack.c.l.b16 %v140
    %v408 = vunpack.c.h.b16 %v140
    %v409 = vunpack.c.l.b16 %v141
    %v410 = vunpack.c.h.b16 %v141
    %v411 = vunpack.c.l.b16 %v142
    %v412 = vunpack.c.h.b16 %v142
    %v413 = vpack.c.b16 %v237, %v233
    %v414 = vpack.c.b16 %v238, %v234
    %v415 = vpack.c.b16 %v239, %v235
    %v416 = vpack.c.b16 %v240, %v236
    %v417 = vpack.c.b16 %v245, %v241
    %v418 = vpack.c.b16 %v246, %v242
    %v419 = vpack.c.b16 %v247, %v243
    %v420 = vpack.c.b16 %v248, %v244
    %v421 = vpack.c.b16 %v253, %v249
    %v422 = vpack.c.b16 %v254, %v250
    %v423 = vpack.c.b16 %v255, %v251
    %v424 = vpack.c.b16 %v256, %v252
    %v425 = vpack.c.b16 %v261, %v257
    %v426 = vpack.c.b16 %v262, %v258
    %v427 = vpack.c.b16 %v263, %v259
    %v428 = vpack.c.b16 %v264, %v260
    %v429 = vpack.c.b16 %v269, %v265
    %v430 = vpack.c.b16 %v270, %v266
    %v431 = vpack.c.b16 %v271, %v267
    %v432 = vpack.c.b16 %v272, %v268
    %v433 = vpack.c.b16 %v277, %v273
    %v434 = vpack.c.b16 %v278, %v274
    %v435 = vpack.c.b16 %v279, %v275
    %v436 = vpack.c.b16 %v280, %v276
    %v437 = vpack.c.b16 %v285, %v281
    %v438 = vpack.c.b16 %v286, %v282
    %v439 = vpack.c.b16 %v287, %v283
    %v440 = vpack.c.b16 %v288, %v284
    %v441 = vpack.c.b16 %v293, %v289
    %v442 = vpack.c.b16 %v294, %v290
    %v443 = vpack.c.b16 %v295, %v291
    %v444 = vpack.c.b16 %v296, %v292
    %v445 = vpack.c.b16 %v301, %v297
    %v446 = vpack.c.b16 %v302, %v298
    %v447 = vpack.c.b16 %v303, %v299
    %v448 = vpack.c.b16 %v304, %v300
    %v449 = vpack.c.b16 %v309, %v305
    %v450 = vpack.c.b16 %v310, %v306
    %v451 = vpack.c.b16 %v311, %v307
    %v452 = vpack.c.b16 %v312, %v308
    %v453 = vpack.c.b16 %v317, %v313
    %v454 = vpack.c.b16 %v318, %v314
    %v455 = vpack.c.b16 %v319, %v315
    %v456 = vpack.c.b16 %v320, %v316
    %v457 = vpack.c.b16 %v325, %v321
    %v458 = vpack.c.b16 %v326, %v322
    %v459 = vpack.c.b16 %v327, %v323
    %v460 = vpack.c.b16 %v328, %v324
    %v461 = vpack.c.b16 %v333, %v329
    %v462 = vpack.c.b16 %v334, %v330
    %v463 = vpack.c.b16 %v335, %v331
    %v464 = vpack.c.b16 %v336, %v332
    %v465 = vpack.c.b16 %v341, %v337
    %v466 = vpack.c.b16 %v342, %v338
    %v467 = vpack.c.b16 %v343, %v339
    %v468 = vpack.c.b16 %v344, %v340
    %v469 = vpack.c.b16 %v349, %v345
    %v470 = vpack.c.b16 %v350, %v346
    %v471 = vpack.c.b16 %v351, %v347
    %v472 = vpack.c.b16 %v352, %v348
    %v473 = vpack.c.b16 %v357, %v353
    %v474 = vpack.c.b16 %v358, %v354
    %v475 = vpack.c.b16 %v359, %v355
    %v476 = vpack.c.b16 %v360, %v356
    %v477 = vpack.c.b16 %v365, %v361
    %v478 = vpack.c.b16 %v366, %v362
    %v479 = vpack.c.b16 %v367, %v363
    %v480 = vpack.c.b16 %v368, %v364
    %v481 = vpack.c.b16 %v373, %v369
    %v482 = vpack.c.b16 %v374, %v370
    %v483 = vpack.c.b16 %v375, %v371
    %v484 = vpack.c.b16 %v376, %v372
    %v485 = vpack.c.b16 %v381, %v377
    %v486 = vpack.c.b16 %v382, %v378
    %v487 = vpack.c.b16 %v383, %v379
    %v488 = vpack.c.b16 %v384, %v380
    %v489 = vpack.c.b16 %v389, %v385
    %v490 = vpack.c.b16 %v390, %v386
    %v491 = vpack.c.b16 %v391, %v387
    %v492 = vpack.c.b16 %v392, %v388
    %v493 = vpack.c.b16 %v397, %v393
    %v494 = vpack.c.b16 %v398, %v394
    %v495 = vpack.c.b16 %v399, %v395
    %v496 = vpack.c.b16 %v400, %v396
    %v497 = vpack.c.b16 %v405, %v401
    %v498 = vpack.c.b16 %v406, %v402
    %v499 = vpack.c.b16 %v407, %v403
    %v500 = vpack.c.b16 %v408, %v404
    %v501 = vpack.c.b16 %v409, %v409
    %v502 = vpack.c.b16 %v410, %v410
    %v503 = vpack.c.b16 %v411, %v411
    %v504 = vpack.c.b16 %v412, %v412
    %vm593 = vcmask 850944
    %v595 = vsel %vm593, %v52, 0
    %vm597 = vcmask 1043456
    %v599 = vsel %vm597, %v501, 0
    %v602 = vsel %vm597, %v502, 0
    %v605 = vsel %vm597, %v503, 0
    %v608 = vsel %vm597, %v504, 0
    %610 = vmatprep.subr.bf16.mxu0 %v414
    %611 = vmatpush1.bf16.msra.mxu0 %v413
    %612 = vmatprep.subr.bf16.mxu0 %v418
    %613 = vmatpush1.bf16.msra.mxu0 %v417
    %614 = vmatprep.subr.bf16.mxu0 %v422
    %615 = vmatpush1.bf16.msra.mxu0 %v421
    %616 = vmatprep.subr.bf16.mxu0 %v426
    %617 = vmatpush1.bf16.msra.mxu0 %v425
    %618 = vmatprep.subr.bf16.mxu0 %v430
    %619 = vmatpush1.bf16.msra.mxu0 %v429
    %620 = vmatprep.subr.bf16.mxu0 %v434
    %621 = vmatpush1.bf16.msra.mxu0 %v433
    %622 = vmatprep.subr.bf16.mxu0 %v438
    %623 = vmatpush1.bf16.msra.mxu0 %v437
    %624 = vmatprep.subr.bf16.mxu0 %v442
    %625 = vmatpush1.bf16.msra.mxu0 %v441
    %626 = vmatprep.subr.bf16.mxu0 %v446
    %627 = vmatpush1.bf16.msra.mxu0 %v445
    %628 = vmatprep.subr.bf16.mxu0 %v450
    %629 = vmatpush1.bf16.msra.mxu0 %v449
    %630 = vmatprep.subr.bf16.mxu0 %v454
    %631 = vmatpush1.bf16.msra.mxu0 %v453
    %632 = vmatprep.subr.bf16.mxu0 %v458
    %633 = vmatpush1.bf16.msra.mxu0 %v457
    %634 = vmatprep.subr.bf16.mxu0 %v462
    %635 = vmatpush1.bf16.msra.mxu0 %v461
    %636 = vmatprep.subr.bf16.mxu0 %v466
    %637 = vmatpush1.bf16.msra.mxu0 %v465
    %638 = vmatprep.subr.bf16.mxu0 %v470
    %639 = vmatpush1.bf16.msra.mxu0 %v469
    %640 = vmatprep.subr.bf16.mxu0 %v474
    %641 = vmatpush1.bf16.msra.mxu0 %v473
    %642 = vmatprep.mubr.bf16.mxu0 %v51
    %643 = vmatmul.mubr.bf16.gmra.mrb[0].mxu0 %v50
    %v644 = vpop.f32.mrb[0].mxu0
    %v645 = vadd.f32 0.0, %v644
    %v646 = vpop.f32.mrb[0].mxu0
    %v647 = vadd.f32 0.0, %v646
    %v648 = vpop.f32.mrb[0].mxu0
    %v649 = vadd.f32 0.0, %v648
    %v650 = vpop.f32.mrb[0].mxu0
    %v651 = vadd.f32 0.0, %v650
    %652 = vdwg.mxu0
    %653 = vmatprep.subr.bf16.mxu0 %v478
    %654 = vmatpush1.bf16.msra.mxu0 %v477
    %655 = vmatprep.subr.bf16.mxu0 %v482
    %656 = vmatpush1.bf16.msra.mxu0 %v481
    %657 = vmatprep.subr.bf16.mxu0 %v486
    %658 = vmatpush1.bf16.msra.mxu0 %v485
    %659 = vmatprep.subr.bf16.mxu0 %v490
    %660 = vmatpush1.bf16.msra.mxu0 %v489
    %661 = vmatprep.subr.bf16.mxu0 %v494
    %662 = vmatpush1.bf16.msra.mxu0 %v493
    %663 = vmatprep.subr.bf16.mxu0 %v498
    %664 = vmatpush1.bf16.msra.mxu0 %v497
    %665 = vmatprep.subr.bf16.mxu0 %v602
    %666 = vmatpush1.bf16.msra.mxu0 %v599
    %667 = vmatprep.subr.bf16.mxu0 0
    %668 = vmatpush1.bf16.msra.mxu0 0
    %669 = vmatprep.subr.bf16.mxu0 0
    %670 = vmatpush1.bf16.msra.mxu0 0
    %671 = vmatprep.subr.bf16.mxu0 0
    %672 = vmatpush1.bf16.msra.mxu0 0
    %673 = vmatprep.subr.bf16.mxu0 0
    %674 = vmatpush1.bf16.msra.mxu0 0
    %675 = vmatprep.subr.bf16.mxu0 0
    %676 = vmatpush1.bf16.msra.mxu0 0
    %677 = vmatprep.subr.bf16.mxu0 0
    %678 = vmatpush1.bf16.msra.mxu0 0
    %679 = vmatprep.subr.bf16.mxu0 0
    %680 = vmatpush1.bf16.msra.mxu0 0
    %681 = vmatprep.subr.bf16.mxu0 0
    %682 = vmatpush1.bf16.msra.mxu0 0
    %683 = vmatprep.subr.bf16.mxu0 0
    %684 = vmatpush1.bf16.msra.mxu0 0
    %685 = vmatprep.mubr.bf16.mxu0 0
    %686 = vmatmul.mubr.bf16.gmra.mrb[0].mxu0 %v595
    %v687 = vpop.f32.mrb[0].mxu0
    %v688 = vadd.f32 %v645, %v687
    %v689 = vpop.f32.mrb[0].mxu0
    %v690 = vadd.f32 %v647, %v689
    %v691 = vpop.f32.mrb[0].mxu0
    %v692 = vadd.f32 %v649, %v691
    %v693 = vpop.f32.mrb[0].mxu0
    %v694 = vadd.f32 %v651, %v693
    %695 = vdwg.mxu0
    %696 = vmatprep.subr.bf16.mxu0 %v416
    %697 = vmatpush1.bf16.msra.mxu0 %v415
    %698 = vmatprep.subr.bf16.mxu0 %v420
    %699 = vmatpush1.bf16.msra.mxu0 %v419
    %700 = vmatprep.subr.bf16.mxu0 %v424
    %701 = vmatpush1.bf16.msra.mxu0 %v423
    %702 = vmatprep.subr.bf16.mxu0 %v428
    %703 = vmatpush1.bf16.msra.mxu0 %v427
    %704 = vmatprep.subr.bf16.mxu0 %v432
    %705 = vmatpush1.bf16.msra.mxu0 %v431
    %706 = vmatprep.subr.bf16.mxu0 %v436
    %707 = vmatpush1.bf16.msra.mxu0 %v435
    %708 = vmatprep.subr.bf16.mxu0 %v440
    %709 = vmatpush1.bf16.msra.mxu0 %v439
    %710 = vmatprep.subr.bf16.mxu0 %v444
    %711 = vmatpush1.bf16.msra.mxu0 %v443
    %712 = vmatprep.subr.bf16.mxu0 %v448
    %713 = vmatpush1.bf16.msra.mxu0 %v447
    %714 = vmatprep.subr.bf16.mxu0 %v452
    %715 = vmatpush1.bf16.msra.mxu0 %v451
    %716 = vmatprep.subr.bf16.mxu0 %v456
    %717 = vmatpush1.bf16.msra.mxu0 %v455
    %718 = vmatprep.subr.bf16.mxu0 %v460
    %719 = vmatpush1.bf16.msra.mxu0 %v459
    %720 = vmatprep.subr.bf16.mxu0 %v464
    %721 = vmatpush1.bf16.msra.mxu0 %v463
    %722 = vmatprep.subr.bf16.mxu0 %v468
    %723 = vmatpush1.bf16.msra.mxu0 %v467
    %724 = vmatprep.subr.bf16.mxu0 %v472
    %725 = vmatpush1.bf16.msra.mxu0 %v471
    %726 = vmatprep.subr.bf16.mxu0 %v476
    %727 = vmatpush1.bf16.msra.mxu0 %v475
    %728 = vmatprep.mubr.bf16.mxu0 %v51
    %729 = vmatmul.mubr.bf16.gmra.mrb[0].mxu0 %v50
    %v730 = vpop.f32.mrb[0].mxu0
    %v731 = vadd.f32 0.0, %v730
    %v732 = vpop.f32.mrb[0].mxu0
    %v733 = vadd.f32 0.0, %v732
    %v734 = vpop.f32.mrb[0].mxu0
    %v735 = vadd.f32 0.0, %v734
    %v736 = vpop.f32.mrb[0].mxu0
    %v737 = vadd.f32 0.0, %v736
    %738 = vdwg.mxu0
    %739 = vmatprep.subr.bf16.mxu0 %v480
    %740 = vmatpush1.bf16.msra.mxu0 %v479
    %741 = vmatprep.subr.bf16.mxu0 %v484
    %742 = vmatpush1.bf16.msra.mxu0 %v483
    %743 = vmatprep.subr.bf16.mxu0 %v488
    %744 = vmatpush1.bf16.msra.mxu0 %v487
    %745 = vmatprep.subr.bf16.mxu0 %v492
    %746 = vmatpush1.bf16.msra.mxu0 %v491
    %747 = vmatprep.subr.bf16.mxu0 %v496
    %748 = vmatpush1.bf16.msra.mxu0 %v495
    %749 = vmatprep.subr.bf16.mxu0 %v500
    %750 = vmatpush1.bf16.msra.mxu0 %v499
    %751 = vmatprep.subr.bf16.mxu0 %v608
    %752 = vmatpush1.bf16.msra.mxu0 %v605
    %753 = vmatprep.subr.bf16.mxu0 0
    %754 = vmatpush1.bf16.msra.mxu0 0
    %755 = vmatprep.subr.bf16.mxu0 0
    %756 = vmatpush1.bf16.msra.mxu0 0
    %757 = vmatprep.subr.bf16.mxu0 0
    %758 = vmatpush1.bf16.msra.mxu0 0
    %759 = vmatprep.subr.bf16.mxu0 0
    %760 = vmatpush1.bf16.msra.mxu0 0
    %761 = vmatprep.subr.bf16.mxu0 0
    %762 = vmatpush1.bf16.msra.mxu0 0
    %763 = vmatprep.subr.bf16.mxu0 0
    %764 = vmatpush1.bf16.msra.mxu0 0
    %765 = vmatprep.subr.bf16.mxu0 0
    %766 = vmatpush1.bf16.msra.mxu0 0
    %767 = vmatprep.subr.bf16.mxu0 0
    %768 = vmatpush1.bf16.msra.mxu0 0
    %769 = vmatprep.subr.bf16.mxu0 0
    %770 = vmatpush1.bf16.msra.mxu0 0
    %771 = vmatprep.mubr.bf16.mxu0 0
    %772 = vmatmul.mubr.bf16.gmra.mrb[0].mxu0 %v595
    %v773 = vpop.f32.mrb[0].mxu0
    %v774 = vadd.f32 %v731, %v773
    %v775 = vpop.f32.mrb[0].mxu0
    %v776 = vadd.f32 %v733, %v775
    %v777 = vpop.f32.mrb[0].mxu0
    %v778 = vadd.f32 %v735, %v777
    %v779 = vpop.f32.mrb[0].mxu0
    %v780 = vadd.f32 %v737, %v779
    %781 = vdwg.mxu0
    %v782 = vmax.f32 %v688, %v774
    %v783 = vmax.f32 %v690, %v776
    %v784 = vmax.f32 %v692, %v778
    %v785 = vmax.f32 %v694, %v780
    %v786 = vmax.f32 %v782, %v783
    %v787 = vmax.f32 %v784, %v785
    %790 = vrot.lane.b32.xlu0 %v786, 64
    %v791 = vpop.permute.xlu0 %790
    %792 = vrot.lane.b32.xlu0 %v787, 64
    %v793 = vpop.permute.xlu0 %792
    %v796 = vmax.f32 %v786, %v791
    %v797 = vmax.f32 %v787, %v793
    %800 = vrot.lane.b32.xlu0 %v796, 96
    %v801 = vpop.permute.xlu0 %800
    %802 = vrot.lane.b32.xlu0 %v797, 96
    %v803 = vpop.permute.xlu0 %802
    %v806 = vmax.f32 %v796, %v801
    %v807 = vmax.f32 %v797, %v803
    %810 = vrot.lane.b32.xlu0 %v806, 112
    %v811 = vpop.permute.xlu0 %810
    %812 = vrot.lane.b32.xlu0 %v807, 112
    %v813 = vpop.permute.xlu0 %812
    %v816 = vmax.f32 %v806, %v811
    %v817 = vmax.f32 %v807, %v813
    %v818 = vld [vmem:[%s2] sm:$0x1]
    %v820 = vlaneseq
    %v821 = vshrl.u32 %v820, 7
    %v822 = vsub.s32 0, %v821
    %v823 = vrot.slane %v818, %v822
    %v825 = vadd.f32 %v816, %v823
    %v826 = vadd.f32 %v817, %v823
    %v827 = vmax.f32 %v825, 0.0
    %v828 = vmax.f32 %v826, 0.0
    %vm829 = vcmask 130048
    %830 = vst.msk [vmem:[#allocation7] sm:$0xff] %vm829, %v827
    %831 = vst.msk [vmem:[#allocation7 + $0x8] sm:$0xff] %vm829, %v828
    // Predicated region
    $region22: #{tpu_custom_call.1} parent=1 // pred_check
      _
    $region23: #{tpu_custom_call.1} parent=1 // pred_check_branch
      %833 = sbr.rel (0) target = $region25
    $region24: #{tpu_custom_call.1} parent=1 // pred_region
      %s835 = ssub.s32 256, 256
      %836 = vsyncadd [#allocation4], %s835
      %s837 = sshll.u32 [#allocation7], 4
      %s838 = int_to_ptr.vmem [resolvable:$true] %s837
      %843 = dma.vmem_to_hbm [thread:$0]  %s838, 256, %s3, [#allocation4], 128, 128, 8
    $region25: #{tpu_custom_call.1} parent=1 // pred_fallthru
      _
    // Predicated region
    $region26: #{tpu_custom_call.1} parent=1 // pred_check
      _
    $region27: #{tpu_custom_call.1} parent=1 // pred_check_branch
      %845 = sbr.rel (0) target = $region29
    $region28: #{tpu_custom_call.1} parent=1 // pred_region
      %846 = dma.done [#allocation4], 256
    $region29: #{tpu_custom_call.1} parent=1 // pred_fallthru
      _
    %847 = vsyncpa [#allocation3], 1
    %848 = vsyncpa [#allocation6], 1
    %849 = vsyncpa [#allocation4], 1

</llo_original>
